<compile_context>
chip_gen: v5e
topology: v5e:2x2
jax: 0.10.0
libtpu: 0.0.40
codegen_flags: <defaults>
</compile_context>

<pallas_src>
import jax
import jax.numpy as jnp
from jax.experimental import pallas as pl
from jax.experimental.pallas import tpu as pltpu

NEG_SLOPE = 0.01  # nn.LeakyReLU default


def _leaky_relu(x):
    return jnp.where(x > 0, x, NEG_SLOPE * x)


def _round_up(x, m):
    return ((x + m - 1) // m) * m


def macritic_kernel(s_ref, a_ref,
                    w1s_ref, w1a_ref, b1_ref,
                    w2_ref, b2_ref,
                    w3_ref, b3_ref,
                    q_ref):
    # fc1 on cat([state, action], 1), as split bf16 matmuls with f32 accumulation.
    h1 = (jnp.dot(s_ref[...], w1s_ref[...], preferred_element_type=jnp.float32)
          + jnp.dot(a_ref[...], w1a_ref[...], preferred_element_type=jnp.float32)
          + b1_ref[...])
    h1 = _leaky_relu(h1)                                   # f32

    # fc2: bf16 MXU matmul, f32 accumulation, f32 activation.
    h2 = (jnp.dot(h1.astype(w2_ref.dtype), w2_ref[...],
                  preferred_element_type=jnp.float32)
          + b2_ref[...])
    h2 = _leaky_relu(h2)                                   # f32

    # fc3 (N = 1): VPU broadcast-multiply + lane reduction, MXU left free.
    q = jnp.sum(h2 * w3_ref[...], axis=-1, keepdims=True) + b3_ref[0, 0]
    q_ref[...] = q.astype(q_ref.dtype)


def macritic_forward(state, action, params, tile_b=512):
    """state: (B, obs_dim) f32, action: (B, act_dim) f32 -> q: (B, 1) f32."""
    B = state.shape[0]
    obs_dim = state.shape[1]
    act_dim = action.shape[1]
    w1s, w1a, b1, w2, b2, w3, b3 = params
    hidden = w2.shape[0]

    # bf16 for the streamed activations and MXU weights (f32 accumulation in
    # the kernel); fc3's tiny weight row and all biases stay f32.
    s_bf = state.astype(jnp.bfloat16)
    a_bf = action.astype(jnp.bfloat16)
    w1s_bf = w1s.astype(jnp.bfloat16)
    w1a_bf = w1a.astype(jnp.bfloat16)
    w2_bf = w2.astype(jnp.bfloat16)
    b1_f = b1.astype(jnp.float32)
    b2_f = b2.astype(jnp.float32)
    w3_row = w3.reshape(1, hidden).astype(jnp.float32)     # (1, hidden)
    b3_s = b3.reshape(1, 1).astype(jnp.float32)            # SMEM scalar

    # Batch tiling: TILE_B is a multiple of 8 (f32/bf16 sublane rule); pad the
    # batch so the grid covers it exactly, slice the pad rows off afterwards.
    TILE_B = min(tile_b, _round_up(B, 8))
    Bp = _round_up(B, TILE_B)
    if Bp != B:
        pad = Bp - B
        s_bf = jnp.pad(s_bf, ((0, pad), (0, 0)))
        a_bf = jnp.pad(a_bf, ((0, pad), (0, 0)))

    grid = (pl.cdiv(Bp, TILE_B),)

    in_specs = [
        # streamed per-tile inputs
        pl.BlockSpec((TILE_B, obs_dim), lambda i: (i, 0)),
        pl.BlockSpec((TILE_B, act_dim), lambda i: (i, 0)),
        # weights / biases: constant index_map -> VMEM-resident across the grid
        pl.BlockSpec((obs_dim, hidden), lambda i: (0, 0)),
        pl.BlockSpec((act_dim, hidden), lambda i: (0, 0)),
        pl.BlockSpec((1, hidden), lambda i: (0, 0)),
        pl.BlockSpec((hidden, hidden), lambda i: (0, 0)),
        pl.BlockSpec((1, hidden), lambda i: (0, 0)),
        pl.BlockSpec((1, hidden), lambda i: (0, 0)),
        # b3 as an SMEM scalar
        pl.BlockSpec(memory_space=pltpu.MemorySpace.SMEM),
    ]
    out_specs = pl.BlockSpec((TILE_B, 1), lambda i: (i, 0))

    q = pl.pallas_call(
        macritic_kernel,
        out_shape=jax.ShapeDtypeStruct((Bp, 1), jnp.float32),
        grid=grid,
        in_specs=in_specs,
        out_specs=out_specs,
        compiler_params=pltpu.CompilerParams(
            dimension_semantics=("parallel",)),
    )(s_bf, a_bf, w1s_bf, w1a_bf, b1_f, w2_bf, b2_f, w3_row, b3_s)

    return q[:B]


def init_params(key, obs_dim, act_dim, hidden_size):
    """Deterministic init mimicking .normal_(0, 0.1) for weights, zeros for bias."""
    k1, k2, k3 = jax.random.split(key, 3)
    in1 = obs_dim + act_dim
    # weights stored (in, out)
    w1 = 0.1 * jax.random.normal(k1, (in1, hidden_size), jnp.float32)
    w2 = 0.1 * jax.random.normal(k2, (hidden_size, hidden_size), jnp.float32)
    w3 = 0.1 * jax.random.normal(k3, (hidden_size, 1), jnp.float32)
    b1 = jnp.zeros((1, hidden_size), jnp.float32)
    b2 = jnp.zeros((1, hidden_size), jnp.float32)
    b3 = jnp.zeros((1, 1), jnp.float32)
    # split W1 rows into state / action halves for the split matmul
    w1s = w1[:obs_dim]
    w1a = w1[obs_dim:]
    return (w1s, w1a, b1, w2, b2, w3, b3)


def reference_forward(state, action, params):
    """Pure-JAX f32 reference of the same forward, for a sanity check."""
    w1s, w1a, b1, w2, b2, w3, b3 = params
    x = jnp.concatenate([state, action], axis=1)
    w1 = jnp.concatenate([w1s, w1a], axis=0)
    h1 = _leaky_relu(x @ w1 + b1)
    h2 = _leaky_relu(h1 @ w2 + b2)
    return h2 @ w3 + b3


if __name__ == "__main__":
    # small, MACritic-consistent sizes; hidden aligned to the 128-lane MXU width
    num_agent, s_dim, a_dim, hidden_size = 2, 8, 4, 128
    obs_dim = s_dim * num_agent    # 16
    act_dim = a_dim * num_agent    # 8
    batch = 50                     # non-multiple of the tile -> exercises padding

    key = jax.random.PRNGKey(0)
    k_s, k_a, k_p = jax.random.split(key, 3)
    state = jax.random.normal(k_s, (batch, obs_dim), jnp.float32)
    action = jax.random.normal(k_a, (batch, act_dim), jnp.float32)
    params = init_params(k_p, obs_dim, act_dim, hidden_size)

    # small tile so the test actually runs several grid steps
    q = macritic_forward(state, action, params, tile_b=16)
    q = jax.block_until_ready(q)

    q_ref = reference_forward(state, action, params)
    assert q.shape == (batch, 1)
    # bf16 inputs/weights (f32 accumulation) => looser tolerance vs f32 reference
    assert jnp.allclose(q, q_ref, atol=3e-2, rtol=3e-2), (
        float(jnp.max(jnp.abs(q - q_ref))))
    print("KERNEL_OK")
</pallas_src>

<mosaic_0001>
module attributes {stable_mosaic.version = 11 : i64} {
  func.func @macritic_kernel(%arg0: i32, %arg1: memref<16x16xbf16, #tpu.memory_space<vmem>>, %arg2: memref<16x8xbf16, #tpu.memory_space<vmem>>, %arg3: memref<16x128xbf16, #tpu.memory_space<vmem>>, %arg4: memref<8x128xbf16, #tpu.memory_space<vmem>>, %arg5: memref<1x128xf32, #tpu.memory_space<vmem>>, %arg6: memref<128x128xbf16, #tpu.memory_space<vmem>>, %arg7: memref<1x128xf32, #tpu.memory_space<vmem>>, %arg8: memref<1x128xf32, #tpu.memory_space<vmem>>, %arg9: memref<1x1xf32, #tpu.memory_space<smem>>, %arg10: memref<16x1xf32, #tpu.memory_space<vmem>>) attributes {dimension_semantics = [#tpu.dimension_semantics<parallel>], iteration_bounds = array<i64: 4>, scalar_prefetch = 0 : i64, scratch_operands = 0 : i64, tpu.core_type = #tpu.core_type<tc>, window_params = [{transform_indices = @transform_0, window_bounds = array<i64: 16, 16>}, {transform_indices = @transform_1, window_bounds = array<i64: 16, 8>}, {pipeline_mode = #tpu.pipeline_mode<synchronous>, transform_indices = @transform_2, window_bounds = array<i64: 16, 128>}, {pipeline_mode = #tpu.pipeline_mode<synchronous>, transform_indices = @transform_3, window_bounds = array<i64: 8, 128>}, {pipeline_mode = #tpu.pipeline_mode<synchronous>, transform_indices = @transform_4, window_bounds = array<i64: 1, 128>}, {pipeline_mode = #tpu.pipeline_mode<synchronous>, transform_indices = @transform_5, window_bounds = array<i64: 128, 128>}, {pipeline_mode = #tpu.pipeline_mode<synchronous>, transform_indices = @transform_6, window_bounds = array<i64: 1, 128>}, {pipeline_mode = #tpu.pipeline_mode<synchronous>, transform_indices = @transform_7, window_bounds = array<i64: 1, 128>}, {transform_indices = @transform_8, window_bounds = array<i64: 1, 1>}, {transform_indices = @transform_9, window_bounds = array<i64: 16, 1>}]} {
    %c0 = arith.constant 0 : index
    %c0_0 = arith.constant 0 : index
    %0 = vector.load %arg1[%c0, %c0_0] : memref<16x16xbf16, #tpu.memory_space<vmem>>, vector<16x16xbf16>
    %c0_1 = arith.constant 0 : index
    %c0_2 = arith.constant 0 : index
    %1 = vector.load %arg3[%c0_1, %c0_2] : memref<16x128xbf16, #tpu.memory_space<vmem>>, vector<16x128xbf16>
    %cst = arith.constant dense<0.000000e+00> : vector<16x128xf32>
    %2 = tpu.matmul %0, %1, %cst {dimension_numbers = #tpu.dot_dimension_numbers<[1], [0], [0], [1], [0, 0, 1, 1], [], []>} : vector<16x16xbf16>, vector<16x128xbf16>, vector<16x128xf32> -> vector<16x128xf32>
    %c0_3 = arith.constant 0 : index
    %c0_4 = arith.constant 0 : index
    %3 = vector.load %arg2[%c0_3, %c0_4] : memref<16x8xbf16, #tpu.memory_space<vmem>>, vector<16x8xbf16>
    %c0_5 = arith.constant 0 : index
    %c0_6 = arith.constant 0 : index
    %4 = vector.load %arg4[%c0_5, %c0_6] : memref<8x128xbf16, #tpu.memory_space<vmem>>, vector<8x128xbf16>
    %cst_7 = arith.constant dense<0.000000e+00> : vector<16x128xf32>
    %5 = tpu.matmul %3, %4, %cst_7 {dimension_numbers = #tpu.dot_dimension_numbers<[1], [0], [0], [1], [0, 0, 1, 1], [], []>} : vector<16x8xbf16>, vector<8x128xbf16>, vector<16x128xf32> -> vector<16x128xf32>
    %6 = arith.addf %2, %5 : vector<16x128xf32>
    %c0_8 = arith.constant 0 : index
    %c0_9 = arith.constant 0 : index
    %7 = vector.load %arg5[%c0_8, %c0_9] : memref<1x128xf32, #tpu.memory_space<vmem>>, vector<1x128xf32>
    %8 = vector.broadcast %7 : vector<1x128xf32> to vector<16x128xf32>
    %9 = arith.addf %6, %8 : vector<16x128xf32>
    %cst_10 = arith.constant 0.000000e+00 : f32
    %10 = vector.broadcast %cst_10 : f32 to vector<16x128xf32>
    %11 = arith.cmpf ogt, %9, %10 : vector<16x128xf32>
    %cst_11 = arith.constant 0.00999999977 : f32
    %12 = vector.broadcast %cst_11 : f32 to vector<16x128xf32>
    %13 = arith.mulf %12, %9 : vector<16x128xf32>
    %14 = arith.select %11, %9, %13 : vector<16x128xi1>, vector<16x128xf32>
    %15 = arith.truncf %14 : vector<16x128xf32> to vector<16x128xbf16>
    %c0_12 = arith.constant 0 : index
    %c0_13 = arith.constant 0 : index
    %16 = vector.load %arg6[%c0_12, %c0_13] : memref<128x128xbf16, #tpu.memory_space<vmem>>, vector<128x128xbf16>
    %cst_14 = arith.constant dense<0.000000e+00> : vector<16x128xf32>
    %17 = tpu.matmul %15, %16, %cst_14 {dimension_numbers = #tpu.dot_dimension_numbers<[1], [0], [0], [1], [0, 0, 1, 1], [], []>} : vector<16x128xbf16>, vector<128x128xbf16>, vector<16x128xf32> -> vector<16x128xf32>
    %c0_15 = arith.constant 0 : index
    %c0_16 = arith.constant 0 : index
    %18 = vector.load %arg7[%c0_15, %c0_16] : memref<1x128xf32, #tpu.memory_space<vmem>>, vector<1x128xf32>
    %19 = vector.broadcast %18 : vector<1x128xf32> to vector<16x128xf32>
    %20 = arith.addf %17, %19 : vector<16x128xf32>
    %cst_17 = arith.constant 0.000000e+00 : f32
    %21 = vector.broadcast %cst_17 : f32 to vector<16x128xf32>
    %22 = arith.cmpf ogt, %20, %21 : vector<16x128xf32>
    %cst_18 = arith.constant 0.00999999977 : f32
    %23 = vector.broadcast %cst_18 : f32 to vector<16x128xf32>
    %24 = arith.mulf %23, %20 : vector<16x128xf32>
    %25 = arith.select %22, %20, %24 : vector<16x128xi1>, vector<16x128xf32>
    %c0_19 = arith.constant 0 : index
    %c0_20 = arith.constant 0 : index
    %26 = vector.load %arg8[%c0_19, %c0_20] : memref<1x128xf32, #tpu.memory_space<vmem>>, vector<1x128xf32>
    %27 = vector.broadcast %26 : vector<1x128xf32> to vector<16x128xf32>
    %28 = arith.mulf %25, %27 : vector<16x128xf32>
    %cst_21 = arith.constant dense<0.000000e+00> : vector<16xf32>
    %29 = vector.multi_reduction <add>, %28, %cst_21 [1] : vector<16x128xf32> to vector<16xf32>
    %30 = vector.shape_cast %29 : vector<16xf32> to vector<16x1xf32>
    %c0_22 = arith.constant 0 : index
    %c0_23 = arith.constant 0 : index
    %31 = memref.load %arg9[%c0_22, %c0_23] : memref<1x1xf32, #tpu.memory_space<smem>>
    %32 = vector.broadcast %31 : f32 to vector<16x1xf32>
    %33 = arith.addf %30, %32 : vector<16x1xf32>
    %c0_24 = arith.constant 0 : index
    %c0_25 = arith.constant 0 : index
    %34 = vector.load %arg10[%c0_24, %c0_25] : memref<16x1xf32, #tpu.memory_space<vmem>>, vector<16x1xf32>
    tpu.vector_store %arg10[%c0_24, %c0_25], %33 {strides = array<i32>} : memref<16x1xf32, #tpu.memory_space<vmem>>, vector<16x1xf32>,
    return
  }
  func.func @transform_0(%arg0: i32) -> (i32, i32) {
    %c0_i32 = arith.constant 0 : i32
    %c0_i32_0 = arith.constant 0 : i32
    return %arg0, %c0_i32 : i32, i32
  }
  func.func @transform_1(%arg0: i32) -> (i32, i32) {
    %c0_i32 = arith.constant 0 : i32
    %c0_i32_0 = arith.constant 0 : i32
    return %arg0, %c0_i32 : i32, i32
  }
  func.func @transform_2(%arg0: i32) -> (i32, i32) {
    %c0_i32 = arith.constant 0 : i32
    %c0_i32_0 = arith.constant 0 : i32
    %c0_i32_1 = arith.constant 0 : i32
    return %c0_i32, %c0_i32_0 : i32, i32
  }
  func.func @transform_3(%arg0: i32) -> (i32, i32) {
    %c0_i32 = arith.constant 0 : i32
    %c0_i32_0 = arith.constant 0 : i32
    %c0_i32_1 = arith.constant 0 : i32
    return %c0_i32, %c0_i32_0 : i32, i32
  }
  func.func @transform_4(%arg0: i32) -> (i32, i32) {
    %c0_i32 = arith.constant 0 : i32
    %c0_i32_0 = arith.constant 0 : i32
    %c0_i32_1 = arith.constant 0 : i32
    return %c0_i32, %c0_i32_0 : i32, i32
  }
  func.func @transform_5(%arg0: i32) -> (i32, i32) {
    %c0_i32 = arith.constant 0 : i32
    %c0_i32_0 = arith.constant 0 : i32
    %c0_i32_1 = arith.constant 0 : i32
    return %c0_i32, %c0_i32_0 : i32, i32
  }
  func.func @transform_6(%arg0: i32) -> (i32, i32) {
    %c0_i32 = arith.constant 0 : i32
    %c0_i32_0 = arith.constant 0 : i32
    %c0_i32_1 = arith.constant 0 : i32
    return %c0_i32, %c0_i32_0 : i32, i32
  }
  func.func @transform_7(%arg0: i32) -> (i32, i32) {
    %c0_i32 = arith.constant 0 : i32
    %c0_i32_0 = arith.constant 0 : i32
    %c0_i32_1 = arith.constant 0 : i32
    return %c0_i32, %c0_i32_0 : i32, i32
  }
  func.func @transform_8(%arg0: i32) -> (i32, i32) {
    %c0_i32 = arith.constant 0 : i32
    %c0_i32_0 = arith.constant 0 : i32
    %c0_i32_1 = arith.constant 0 : i32
    return %c0_i32, %c0_i32_0 : i32, i32
  }
  func.func @transform_9(%arg0: i32) -> (i32, i32) {
    %c0_i32 = arith.constant 0 : i32
    %c0_i32_0 = arith.constant 0 : i32
    return %arg0, %c0_i32 : i32, i32
  }
}

</mosaic_0001>

<llo_original>
// kernel: tpu_custom_call.1
$region0: #{tpu_custom_call.1}
  #allocation0 [shape = 'u32[]', space=smem, size = 0x4, offset = 0x4, fixed_abs, tag = 'smem constant byte address 0x4 - core index']
  #allocation1 [shape = 'u32[72,128]{1,0:T(1,128)}', space=vmem, size = 0x9000, scoped, tag = 'internal scratch']
  #allocation2 [shape = 'f32[1,1]{1,0:T(1,128)S(6)}', space=smem, size = 0x200, scoped, tag = 'scoped memory for tpu_custom_call.1']
  %s0 = inlined_call_operand.vmem [shape: bf16[64,16], index: 0, kind: input, shape index: {}]
  %s1 = inlined_call_operand.vmem [shape: bf16[64,8], index: 1, kind: input, shape index: {}]
  %s2 = inlined_call_operand.vmem [shape: bf16[16,128], index: 2, kind: input, shape index: {}]
  %s3 = inlined_call_operand.vmem [shape: bf16[8,128], index: 3, kind: input, shape index: {}]
  %s4 = inlined_call_operand.vmem [shape: f32[1,128], index: 4, kind: input, shape index: {}]
  %s5 = inlined_call_operand.vmem [shape: bf16[128,128], index: 5, kind: input, shape index: {}]
  %s6 = inlined_call_operand.vmem [shape: f32[1,128], index: 6, kind: input, shape index: {}]
  %s7 = inlined_call_operand.vmem [shape: f32[1,128], index: 7, kind: input, shape index: {}]
  %s8 = inlined_call_operand.<no memory space> [shape: f32[1,1], index: 8, kind: input, shape index: {}]
  %s9 = inlined_call_operand.vmem [shape: f32[64,1], index: 9, kind: output, shape index: {}]
  %s10 = sld [smem:[#allocation0]]
  $region69: #{tpu_custom_call.1} parent=0
    _
  %s12 = ssub.s32 1, %s10
  %s13 = scalar_select 0, %s12, %s10
  %14 = sst [smem:[#allocation2]] %s8
  loop: start=0, step=1, limit=6
  $region2: #{tpu_custom_call.1} parent=0 // loop_pre_header
    _
  $region3: #{tpu_custom_call.1} parent=0 // loop_header
    %s16 = sphi 0, %s20
    %p17 = scmp.ge.s32.totalorder %s16, 6
    %s26 = sphi 0, %s28
    %s29 = sphi 0, %s26
    %s30 = sphi 0, %s29
    %s46 = sphi 0, %s30
    %s52 = sphi 0, %s54
    %s55 = sphi 0, %s52
    %s56 = sphi 0, %s55
    %s72 = sphi 0, %s56
    %s76 = sphi 0, %s76
    %s78 = sphi 0, %s76
    %s79 = sphi 0, %s78
    %s93 = sphi 0, %s79
    %s97 = sphi 0, %s97
    %s99 = sphi 0, %s97
    %s100 = sphi 0, %s99
    %s114 = sphi 0, %s100
    %s118 = sphi 0, %s118
    %s120 = sphi 0, %s118
    %s121 = sphi 0, %s120
    %s135 = sphi 0, %s121
    %s139 = sphi 0, %s139
    %s141 = sphi 0, %s139
    %s142 = sphi 0, %s141
    %s156 = sphi 0, %s142
    %s160 = sphi 0, %s160
    %s162 = sphi 0, %s160
    %s163 = sphi 0, %s162
    %s177 = sphi 0, %s163
    %s181 = sphi 0, %s181
    %s183 = sphi 0, %s181
    %s184 = sphi 0, %s183
    %s198 = sphi 0, %s184
    %s202 = sphi 0, %s202
    %s204 = sphi 0, %s202
    %s205 = sphi 0, %s204
    %s219 = sphi 0, %s205
    %s225 = sphi 0, %s227
    %s228 = sphi 0, %s225
    %s229 = sphi 0, %s228
    %s245 = sphi 0, %s229
  $region4: #{tpu_custom_call.1} parent=0 // loop_header_branch
    %19 = sbr.rel (%p17) target = $region8
  $region5: #{tpu_custom_call.1} parent=0 // loop_body
    %s21 = ssub.s32 %s16, 1
    %s22 = ssub.s32 %s16, 2
    %s23 = sadd.s32 %s16, 1
    %s24 = ssub.s32 %s16, %s23
    %p25 = scmp.eq.s32.totalorder %s24, 0
    %s27 = sadd.s32 %s26, 1
    %s28 = scalar_select %p25, %s26, %s27
    %p31 = pneg %p25
    %p32 = scmp.eq.s32.totalorder %s16, 3
    %p33 = por %p31, %p32
    %p34 = scmp.ne.s32.totalorder %s26, %s29
    %p35 = scmp.eq.s32.totalorder %s16, 0
    %p36 = por %p34, %p35
    %p37 = scmp.ne.s32.totalorder %s26, %s29
    %p38 = scmp.eq.s32.totalorder %s21, 3
    %p39 = por %p37, %p38
    %p40 = scmp.ne.s32.totalorder %s29, %s30
    %p41 = scmp.eq.s32.totalorder %s21, 0
    %p42 = por %p40, %p41
    %p43 = scmp.ne.s32.totalorder %s29, %s30
    %p44 = scmp.eq.s32.totalorder %s22, 3
    %p45 = por %p43, %p44
    %p47 = scmp.ne.s32.totalorder %s30, %s46
    %p48 = scmp.eq.s32.totalorder %s22, 0
    %p49 = por %p47, %p48
    %s50 = ssub.s32 %s16, %s23
    %p51 = scmp.eq.s32.totalorder %s50, 0
    %s53 = sadd.s32 %s52, 1
    %s54 = scalar_select %p51, %s52, %s53
    %p57 = pneg %p51
    %p58 = scmp.eq.s32.totalorder %s16, 3
    %p59 = por %p57, %p58
    %p60 = scmp.ne.s32.totalorder %s52, %s55
    %p61 = scmp.eq.s32.totalorder %s16, 0
    %p62 = por %p60, %p61
    %p63 = scmp.ne.s32.totalorder %s52, %s55
    %p64 = scmp.eq.s32.totalorder %s21, 3
    %p65 = por %p63, %p64
    %p66 = scmp.ne.s32.totalorder %s55, %s56
    %p67 = scmp.eq.s32.totalorder %s21, 0
    %p68 = por %p66, %p67
    %p69 = scmp.ne.s32.totalorder %s55, %s56
    %p70 = scmp.eq.s32.totalorder %s22, 3
    %p71 = por %p69, %p70
    %p73 = scmp.ne.s32.totalorder %s56, %s72
    %p74 = scmp.eq.s32.totalorder %s22, 0
    %p75 = por %p73, %p74
    %s77 = sadd.s32 %s76, 1
    %p80 = scmp.eq.s32.totalorder %s16, 3
    %p81 = scmp.ne.s32.totalorder %s76, %s78
    %p82 = scmp.eq.s32.totalorder %s16, 0
    %p83 = por %p81, %p82
    %p84 = scmp.ne.s32.totalorder %s76, %s78
    %p85 = scmp.eq.s32.totalorder %s21, 3
    %p86 = por %p84, %p85
    %p87 = scmp.ne.s32.totalorder %s78, %s79
    %p88 = scmp.eq.s32.totalorder %s21, 0
    %p89 = por %p87, %p88
    %p90 = scmp.ne.s32.totalorder %s78, %s79
    %p91 = scmp.eq.s32.totalorder %s22, 3
    %p92 = por %p90, %p91
    %p94 = scmp.ne.s32.totalorder %s79, %s93
    %p95 = scmp.eq.s32.totalorder %s22, 0
    %p96 = por %p94, %p95
    %s98 = sadd.s32 %s97, 1
    %p101 = scmp.eq.s32.totalorder %s16, 3
    %p102 = scmp.ne.s32.totalorder %s97, %s99
    %p103 = scmp.eq.s32.totalorder %s16, 0
    %p104 = por %p102, %p103
    %p105 = scmp.ne.s32.totalorder %s97, %s99
    %p106 = scmp.eq.s32.totalorder %s21, 3
    %p107 = por %p105, %p106
    %p108 = scmp.ne.s32.totalorder %s99, %s100
    %p109 = scmp.eq.s32.totalorder %s21, 0
    %p110 = por %p108, %p109
    %p111 = scmp.ne.s32.totalorder %s99, %s100
    %p112 = scmp.eq.s32.totalorder %s22, 3
    %p113 = por %p111, %p112
    %p115 = scmp.ne.s32.totalorder %s100, %s114
    %p116 = scmp.eq.s32.totalorder %s22, 0
    %p117 = por %p115, %p116
    %s119 = sadd.s32 %s118, 1
    %p122 = scmp.eq.s32.totalorder %s16, 3
    %p123 = scmp.ne.s32.totalorder %s118, %s120
    %p124 = scmp.eq.s32.totalorder %s16, 0
    %p125 = por %p123, %p124
    %p126 = scmp.ne.s32.totalorder %s118, %s120
    %p127 = scmp.eq.s32.totalorder %s21, 3
    %p128 = por %p126, %p127
    %p129 = scmp.ne.s32.totalorder %s120, %s121
    %p130 = scmp.eq.s32.totalorder %s21, 0
    %p131 = por %p129, %p130
    %p132 = scmp.ne.s32.totalorder %s120, %s121
    %p133 = scmp.eq.s32.totalorder %s22, 3
    %p134 = por %p132, %p133
    %p136 = scmp.ne.s32.totalorder %s121, %s135
    %p137 = scmp.eq.s32.totalorder %s22, 0
    %p138 = por %p136, %p137
    %s140 = sadd.s32 %s139, 1
    %p143 = scmp.eq.s32.totalorder %s16, 3
    %p144 = scmp.ne.s32.totalorder %s139, %s141
    %p145 = scmp.eq.s32.totalorder %s16, 0
    %p146 = por %p144, %p145
    %p147 = scmp.ne.s32.totalorder %s139, %s141
    %p148 = scmp.eq.s32.totalorder %s21, 3
    %p149 = por %p147, %p148
    %p150 = scmp.ne.s32.totalorder %s141, %s142
    %p151 = scmp.eq.s32.totalorder %s21, 0
    %p152 = por %p150, %p151
    %p153 = scmp.ne.s32.totalorder %s141, %s142
    %p154 = scmp.eq.s32.totalorder %s22, 3
    %p155 = por %p153, %p154
    %p157 = scmp.ne.s32.totalorder %s142, %s156
    %p158 = scmp.eq.s32.totalorder %s22, 0
    %p159 = por %p157, %p158
    %s161 = sadd.s32 %s160, 1
    %p164 = scmp.eq.s32.totalorder %s16, 3
    %p165 = scmp.ne.s32.totalorder %s160, %s162
    %p166 = scmp.eq.s32.totalorder %s16, 0
    %p167 = por %p165, %p166
    %p168 = scmp.ne.s32.totalorder %s160, %s162
    %p169 = scmp.eq.s32.totalorder %s21, 3
    %p170 = por %p168, %p169
    %p171 = scmp.ne.s32.totalorder %s162, %s163
    %p172 = scmp.eq.s32.totalorder %s21, 0
    %p173 = por %p171, %p172
    %p174 = scmp.ne.s32.totalorder %s162, %s163
    %p175 = scmp.eq.s32.totalorder %s22, 3
    %p176 = por %p174, %p175
    %p178 = scmp.ne.s32.totalorder %s163, %s177
    %p179 = scmp.eq.s32.totalorder %s22, 0
    %p180 = por %p178, %p179
    %s182 = sadd.s32 %s181, 1
    %p185 = scmp.eq.s32.totalorder %s16, 3
    %p186 = scmp.ne.s32.totalorder %s181, %s183
    %p187 = scmp.eq.s32.totalorder %s16, 0
    %p188 = por %p186, %p187
    %p189 = scmp.ne.s32.totalorder %s181, %s183
    %p190 = scmp.eq.s32.totalorder %s21, 3
    %p191 = por %p189, %p190
    %p192 = scmp.ne.s32.totalorder %s183, %s184
    %p193 = scmp.eq.s32.totalorder %s21, 0
    %p194 = por %p192, %p193
    %p195 = scmp.ne.s32.totalorder %s183, %s184
    %p196 = scmp.eq.s32.totalorder %s22, 3
    %p197 = por %p195, %p196
    %p199 = scmp.ne.s32.totalorder %s184, %s198
    %p200 = scmp.eq.s32.totalorder %s22, 0
    %p201 = por %p199, %p200
    %s203 = sadd.s32 %s202, 1
    %p206 = scmp.eq.s32.totalorder %s16, 3
    %p207 = scmp.ne.s32.totalorder %s202, %s204
    %p208 = scmp.eq.s32.totalorder %s16, 0
    %p209 = por %p207, %p208
    %p210 = scmp.ne.s32.totalorder %s202, %s204
    %p211 = scmp.eq.s32.totalorder %s21, 3
    %p212 = por %p210, %p211
    %p213 = scmp.ne.s32.totalorder %s204, %s205
    %p214 = scmp.eq.s32.totalorder %s21, 0
    %p215 = por %p213, %p214
    %p216 = scmp.ne.s32.totalorder %s204, %s205
    %p217 = scmp.eq.s32.totalorder %s22, 3
    %p218 = por %p216, %p217
    %p220 = scmp.ne.s32.totalorder %s205, %s219
    %p221 = scmp.eq.s32.totalorder %s22, 0
    %p222 = por %p220, %p221
    %s223 = ssub.s32 %s16, %s23
    %p224 = scmp.eq.s32.totalorder %s223, 0
    %s226 = sadd.s32 %s225, 1
    %s227 = scalar_select %p224, %s225, %s226
    %p230 = pneg %p224
    %p231 = scmp.eq.s32.totalorder %s16, 3
    %p232 = por %p230, %p231
    %p233 = scmp.ne.s32.totalorder %s225, %s228
    %p234 = scmp.eq.s32.totalorder %s16, 0
    %p235 = por %p233, %p234
    %p236 = scmp.ne.s32.totalorder %s225, %s228
    %p237 = scmp.eq.s32.totalorder %s21, 3
    %p238 = por %p236, %p237
    %p239 = scmp.ne.s32.totalorder %s228, %s229
    %p240 = scmp.eq.s32.totalorder %s21, 0
    %p241 = por %p239, %p240
    %p242 = scmp.ne.s32.totalorder %s228, %s229
    %p243 = scmp.eq.s32.totalorder %s22, 3
    %p244 = por %p242, %p243
    %p246 = scmp.ne.s32.totalorder %s229, %s245
    %p247 = scmp.eq.s32.totalorder %s22, 0
    %p248 = por %p246, %p247
    %p249 = scmp.le.s32.totalorder 1, %s16
    %p250 = scmp.lt.s32.totalorder %s16, 5
    %p251 = pnand %p249, %p250
    %p252 = pneg %p251
    // Predicated region
    $region9: #{tpu_custom_call.1} parent=5 // pred_check
      _
    $region10: #{tpu_custom_call.1} parent=5 // pred_check_branch
      %254 = sbr.rel (%p251) target = $region12
    $region11: #{tpu_custom_call.1} parent=5 // pred_region
      %s255 = ssub.s32 %s16, 1
      // Predicated region
      $region13: #{tpu_custom_call.1} parent=11 // pred_check
        %p256 = pneg %p89
      $region14: #{tpu_custom_call.1} parent=11 // pred_check_branch
        %258 = sbr.rel (%p256) target = $region16
      $region15: #{tpu_custom_call.1} parent=11 // pred_region
        _
      $region16: #{tpu_custom_call.1} parent=11 // pred_fallthru
        _
      // Predicated region
      $region17: #{tpu_custom_call.1} parent=11 // pred_check
        %p259 = pneg %p110
      $region18: #{tpu_custom_call.1} parent=11 // pred_check_branch
        %261 = sbr.rel (%p259) target = $region20
      $region19: #{tpu_custom_call.1} parent=11 // pred_region
        _
      $region20: #{tpu_custom_call.1} parent=11 // pred_fallthru
        _
      // Predicated region
      $region21: #{tpu_custom_call.1} parent=11 // pred_check
        %p262 = pneg %p131
      $region22: #{tpu_custom_call.1} parent=11 // pred_check_branch
        %264 = sbr.rel (%p262) target = $region24
      $region23: #{tpu_custom_call.1} parent=11 // pred_region
        _
      $region24: #{tpu_custom_call.1} parent=11 // pred_fallthru
        _
      // Predicated region
      $region25: #{tpu_custom_call.1} parent=11 // pred_check
        %p265 = pneg %p152
      $region26: #{tpu_custom_call.1} parent=11 // pred_check_branch
        %267 = sbr.rel (%p265) target = $region28
      $region27: #{tpu_custom_call.1} parent=11 // pred_region
        _
      $region28: #{tpu_custom_call.1} parent=11 // pred_fallthru
        _
      // Predicated region
      $region29: #{tpu_custom_call.1} parent=11 // pred_check
        %p268 = pneg %p173
      $region30: #{tpu_custom_call.1} parent=11 // pred_check_branch
        %270 = sbr.rel (%p268) target = $region32
      $region31: #{tpu_custom_call.1} parent=11 // pred_region
        _
      $region32: #{tpu_custom_call.1} parent=11 // pred_fallthru
        _
      // Predicated region
      $region33: #{tpu_custom_call.1} parent=11 // pred_check
        %p271 = pneg %p194
      $region34: #{tpu_custom_call.1} parent=11 // pred_check_branch
        %273 = sbr.rel (%p271) target = $region36
      $region35: #{tpu_custom_call.1} parent=11 // pred_region
        _
      $region36: #{tpu_custom_call.1} parent=11 // pred_fallthru
        _
      // Predicated region
      $region37: #{tpu_custom_call.1} parent=11 // pred_check
        %p274 = pneg %p215
      $region38: #{tpu_custom_call.1} parent=11 // pred_check_branch
        %276 = sbr.rel (%p274) target = $region40
      $region39: #{tpu_custom_call.1} parent=11 // pred_region
        _
      $region40: #{tpu_custom_call.1} parent=11 // pred_fallthru
        _
    $region12: #{tpu_custom_call.1} parent=5 // pred_fallthru
      _
    %p277 = scmp.lt.s32.totalorder %s16, 4
    // Predicated region
    $region41: #{tpu_custom_call.1} parent=5 // pred_check
      %p278 = pneg %p277
    $region42: #{tpu_custom_call.1} parent=5 // pred_check_branch
      %280 = sbr.rel (%p278) target = $region44
    $region43: #{tpu_custom_call.1} parent=5 // pred_region
      // Predicated region
      $region45: #{tpu_custom_call.1} parent=43 // pred_check
        %p281 = pneg %p36
      $region46: #{tpu_custom_call.1} parent=43 // pred_check_branch
        %283 = sbr.rel (%p281) target = $region48
      $region47: #{tpu_custom_call.1} parent=43 // pred_region
        %s284 = smul.u32 2, %s16
        %p285 = scmp.lt.s32.totalorder %s284, 7
        %s286 = scalar_select %p285, %s284, 7
        %s287 = smul.addr %s286, 4
        %s288 = scalar_lea.vmem %s0, %s287
        %s289 = smul.u32 2, %s16
      $region48: #{tpu_custom_call.1} parent=43 // pred_fallthru
        _
      // Predicated region
      $region49: #{tpu_custom_call.1} parent=43 // pred_check
        %p290 = pneg %p62
      $region50: #{tpu_custom_call.1} parent=43 // pred_check_branch
        %292 = sbr.rel (%p290) target = $region52
      $region51: #{tpu_custom_call.1} parent=43 // pred_region
        %s293 = smul.u32 2, %s16
        %p294 = scmp.lt.s32.totalorder %s293, 7
        %s295 = scalar_select %p294, %s293, 7
        %s296 = smul.addr %s295, 4
        %s297 = scalar_lea.vmem %s1, %s296
        %s298 = smul.u32 2, %s16
      $region52: #{tpu_custom_call.1} parent=43 // pred_fallthru
        _
    $region44: #{tpu_custom_call.1} parent=5 // pred_fallthru
      _
    %p299 = scmp.le.s32.totalorder 1, %s16
    %p300 = scmp.lt.s32.totalorder %s16, 5
    %p301 = pnand %p299, %p300
    %p302 = pneg %p301
    // Predicated region
    $region53: #{tpu_custom_call.1} parent=5 // pred_check
      _
    $region54: #{tpu_custom_call.1} parent=5 // pred_check_branch
      %304 = sbr.rel (%p301) target = $region56
    $region55: #{tpu_custom_call.1} parent=5 // pred_region
      %s305 = ssub.s32 %s16, 1
      %s306 = smul.u32 2, %s21
      %p307 = scmp.lt.s32.totalorder %s306, 7
      %s308 = scalar_select %p307, %s306, 7
      %s309 = smul.addr %s308, 4
      %s310 = scalar_lea.vmem %s0, %s309
      %p311 = pneg %p42
      %p312 = pneg %p39
      %s313 = smul.u32 2, %s21
      %p314 = scmp.lt.s32.totalorder %s313, 7
      %s315 = scalar_select %p314, %s313, 7
      %s316 = smul.addr %s315, 4
      %s317 = scalar_lea.vmem %s1, %s316
      %p318 = pneg %p68
      %p319 = pneg %p65
      %p320 = pneg %p89
      %p321 = pneg %p86
      %p322 = pneg %p110
      %p323 = pneg %p107
      %p324 = pneg %p131
      %p325 = pneg %p128
      %p326 = pneg %p152
      %p327 = pneg %p149
      %p328 = pneg %p173
      %p329 = pneg %p170
      %p330 = pneg %p194
      %p331 = pneg %p191
      %p332 = pneg %p215
      %p333 = pneg %p212
      %p334 = pneg %p241
      %p335 = pneg %p238
      %s336 = smul.u32 2, %s21
      %p337 = scmp.lt.s32.totalorder %s336, 7
      %s338 = scalar_select %p337, %s336, 7
      %s339 = smul.addr %s338, 8
      %s340 = scalar_lea.vmem %s9, %s339
      %s341 = smul.u32 2, %s21
      %p342 = scmp.lt.s32.totalorder %s341, 7
      %s343 = scalar_select %p342, %s341, 7
      %s344 = smul.addr %s343, 4
      %s345 = scalar_lea.vmem %s0, %s344
      %s346 = smul.u32 2, %s21
      %s347 = smul.u32 2, %s21
      %p348 = scmp.lt.s32.totalorder %s347, 7
      %s349 = scalar_select %p348, %s347, 7
      %s350 = smul.addr %s349, 4
      %s351 = scalar_lea.vmem %s1, %s350
      %s352 = smul.u32 2, %s21
      %s353 = smul.u32 2, %s21
      %p354 = scmp.lt.s32.totalorder %s353, 7
      %s355 = scalar_select %p354, %s353, 7
      %s356 = smul.addr %s355, 8
      %s357 = scalar_lea.vmem %s9, %s356
      %s358 = smul.u32 2, %s21
      %v360 = vld [vmem:[%s345] sm:$0xf]
      %v361 = vld [vmem:[%s345 + $0x4] sm:$0xf]
      %v362 = vld [vmem:[%s2] sm:$0xf]
      %v363 = vld [vmem:[%s2 + $0x4] sm:$0xf]
      %v364 = vld [vmem:[%s351] sm:$0xf]
      %v365 = vld [vmem:[%s351 + $0x4] sm:$0xf]
      %v366 = vld [vmem:[%s3] sm:$0xf]
      %v369 = vunpack.c.l.b16 %v364
      %v370 = vunpack.c.l.b16 %v365
      %v371 = vpack.c.b16 %v370, %v369
      %vm372 = vcmask 64512
      %v374 = vsel %vm372, %v371, 0
      %vm376 = vcmask 1043456
      %v378 = vsel %vm376, %v366, 0
      %380 = vmatpush.bf16.msra.mxu0 0
      %381 = vmatpush.bf16.msra.mxu0 0
      %382 = vmatpush.bf16.msra.mxu0 0
      %383 = vmatpush.bf16.msra.mxu0 0
      %384 = vmatpush.bf16.msra.mxu0 0
      %385 = vmatpush.bf16.msra.mxu0 0
      %386 = vmatpush.bf16.msra.mxu0 0
      %387 = vmatpush.bf16.msra.mxu0 %v378
      %388 = vmatmul.bf16.gmra.mxu0 %v374
      %v389 = vpop.f32.mrf.mxu0
      %v390 = vadd.f32 0.0, %v389
      %v391 = vpop.f32.mrf.mxu0
      %v392 = vadd.f32 0.0, %v391
      %393 = vdwg.mxu0
      %v396 = vunpack.c.l.b16 %v360
      %v397 = vunpack.c.l.b16 %v361
      %v398 = vpack.c.b16 %v397, %v396
      %v401 = vunpack.c.l.b16 %v362
      %v402 = vunpack.c.l.b16 %v363
      %v403 = vpack.c.b16 %v402, %v401
      %vm405 = vcmask 130048
      %v407 = vsel %vm405, %v398, 0
      %409 = vmatpush.bf16.msra.mxu0 0
      %410 = vmatpush.bf16.msra.mxu0 0
      %411 = vmatpush.bf16.msra.mxu0 0
      %412 = vmatpush.bf16.msra.mxu0 0
      %413 = vmatpush.bf16.msra.mxu0 0
      %414 = vmatpush.bf16.msra.mxu0 0
      %415 = vmatpush.bf16.msra.mxu0 0
      %416 = vmatpush.bf16.msra.mxu0 %v403
      %417 = vmatmul.bf16.gmra.mxu0 %v407
      %v418 = vpop.f32.mrf.mxu0
      %v419 = vadd.f32 %v390, %v418
      %v420 = vpop.f32.mrf.mxu0
      %v421 = vadd.f32 %v392, %v420
      %422 = vdwg.mxu0
      %v423 = vld [vmem:[%s4] sm:$0x1]
      %v425 = vperm.slane %v423, 0
      %v427 = vadd.f32 %v419, %v425
      %v428 = vadd.f32 %v421, %v425
      %vm429 = vcmp.gt.f32.partialorder %v427, 0.0
      %vm430 = vcmp.gt.f32.partialorder %v428, 0.0
      %v431 = vmul.f32 %v427, 0.01
      %v432 = vmul.f32 %v428, 0.01
      %v433 = vsel %vm429, %v427, %v431
      %v434 = vsel %vm430, %v428, %v432
      %v435 = vpack.c.bf16 %v434, %v433
      %v436 = vld [vmem:[%s5] sm:$0xf]
      %v437 = vld [vmem:[%s5 + $0x4] sm:$0xf]
      %v438 = vld [vmem:[%s5 + $0x8] sm:$0xf]
      %v439 = vld [vmem:[%s5 + $0xc] sm:$0xf]
      %v440 = vld [vmem:[%s5 + $0x10] sm:$0xf]
      %v441 = vld [vmem:[%s5 + $0x14] sm:$0xf]
      %v442 = vld [vmem:[%s5 + $0x18] sm:$0xf]
      %v443 = vld [vmem:[%s5 + $0x1c] sm:$0xf]
      %v444 = vld [vmem:[%s5 + $0x20] sm:$0xf]
      %v445 = vld [vmem:[%s5 + $0x24] sm:$0xf]
      %v446 = vld [vmem:[%s5 + $0x28] sm:$0xf]
      %v447 = vld [vmem:[%s5 + $0x2c] sm:$0xf]
      %v448 = vld [vmem:[%s5 + $0x30] sm:$0xf]
      %v449 = vld [vmem:[%s5 + $0x34] sm:$0xf]
      %v450 = vld [vmem:[%s5 + $0x38] sm:$0xf]
      %v451 = vld [vmem:[%s5 + $0x3c] sm:$0xf]
      %v452 = vld [vmem:[%s6] sm:$0x1]
      %v454 = vperm.slane %v452, 0
      %v472 = vunpack.c.l.b16 %v436
      %v473 = vunpack.c.l.b16 %v437
      %v474 = vunpack.c.l.b16 %v438
      %v475 = vunpack.c.l.b16 %v439
      %v476 = vunpack.c.l.b16 %v440
      %v477 = vunpack.c.l.b16 %v441
      %v478 = vunpack.c.l.b16 %v442
      %v479 = vunpack.c.l.b16 %v443
      %v480 = vunpack.c.l.b16 %v444
      %v481 = vunpack.c.l.b16 %v445
      %v482 = vunpack.c.l.b16 %v446
      %v483 = vunpack.c.l.b16 %v447
      %v484 = vunpack.c.l.b16 %v448
      %v485 = vunpack.c.l.b16 %v449
      %v486 = vunpack.c.l.b16 %v450
      %v487 = vunpack.c.l.b16 %v451
      %v488 = vpack.c.b16 %v473, %v472
      %v489 = vpack.c.b16 %v475, %v474
      %v490 = vpack.c.b16 %v477, %v476
      %v491 = vpack.c.b16 %v479, %v478
      %v492 = vpack.c.b16 %v481, %v480
      %v493 = vpack.c.b16 %v483, %v482
      %v494 = vpack.c.b16 %v485, %v484
      %v495 = vpack.c.b16 %v487, %v486
      %504 = vmatpush.bf16.msra.mxu0 %v495
      %505 = vmatpush.bf16.msra.mxu0 %v494
      %506 = vmatpush.bf16.msra.mxu0 %v493
      %507 = vmatpush.bf16.msra.mxu0 %v492
      %508 = vmatpush.bf16.msra.mxu0 %v491
      %509 = vmatpush.bf16.msra.mxu0 %v490
      %510 = vmatpush.bf16.msra.mxu0 %v489
      %511 = vmatpush.bf16.msra.mxu0 %v488
      %512 = vmatmul.bf16.gmra.mxu0 %v435
      %v513 = vpop.f32.mrf.mxu0
      %v514 = vadd.f32 %v454, %v513
      %v515 = vpop.f32.mrf.mxu0
      %v516 = vadd.f32 %v454, %v515
      %517 = vdwg.mxu0
      %vm518 = vcmp.gt.f32.partialorder %v514, 0.0
      %vm519 = vcmp.gt.f32.partialorder %v516, 0.0
      %v520 = vmul.f32 %v514, 0.01
      %v521 = vmul.f32 %v516, 0.01
      %v522 = vsel %vm518, %v514, %v520
      %v523 = vsel %vm519, %v516, %v521
      %v524 = vld [vmem:[%s7] sm:$0x1]
      %v526 = vperm.slane %v524, 0
      %v528 = vmul.f32 %v522, %v526
      %v529 = vmul.f32 %v523, %v526
      %530 = vadd.xlane.f32.xlu0 %v528
      %v531 = vpop.xlane.xlu0 %530
      %532 = vadd.xlane.f32.xlu0 %v529
      %v533 = vpop.xlane.xlu0 %532
      %s534 = sld [smem:[#allocation2]]
      %v535 = vstv %s534
      %v536 = vadd.f32 %v531, %v535
      %v537 = vadd.f32 %v533, %v535
      %vm538 = vcmask 7168
      %539 = vst.msk [vmem:[%s357] sm:$0xff] %vm538, %v536
      %540 = vst.msk [vmem:[%s357 + $0x8] sm:$0xff] %vm538, %v537
      %s541 = smul.u32 2, %s21
      %p542 = scmp.lt.s32.totalorder %s541, 7
      %s543 = scalar_select %p542, %s541, 7
      %s544 = smul.addr %s543, 8
      %s545 = scalar_lea.vmem %s9, %s544
      // Predicated region
      $region57: #{tpu_custom_call.1} parent=55 // pred_check
        %p546 = pneg %p238
      $region58: #{tpu_custom_call.1} parent=55 // pred_check_branch
        %548 = sbr.rel (%p546) target = $region60
      $region59: #{tpu_custom_call.1} parent=55 // pred_region
        %s549 = smul.u32 2, %s21
      $region60: #{tpu_custom_call.1} parent=55 // pred_fallthru
        _
    $region56: #{tpu_custom_call.1} parent=5 // pred_fallthru
      _
    %p550 = scmp.le.s32.totalorder 2, %s16
    // Predicated region
    $region61: #{tpu_custom_call.1} parent=5 // pred_check
      %p551 = pneg %p550
    $region62: #{tpu_custom_call.1} parent=5 // pred_check_branch
      %553 = sbr.rel (%p551) target = $region64
    $region63: #{tpu_custom_call.1} parent=5 // pred_region
      %s554 = ssub.s32 %s16, 2
      // Predicated region
      $region65: #{tpu_custom_call.1} parent=63 // pred_check
        %p555 = pneg %p244
      $region66: #{tpu_custom_call.1} parent=63 // pred_check_branch
        %557 = sbr.rel (%p555) target = $region68
      $region67: #{tpu_custom_call.1} parent=63 // pred_region
        %s558 = smul.u32 2, %s22
        %p559 = scmp.lt.s32.totalorder %s558, 7
        %s560 = scalar_select %p559, %s558, 7
        %s561 = smul.addr %s560, 8
        %s562 = scalar_lea.vmem %s9, %s561
      $region68: #{tpu_custom_call.1} parent=63 // pred_fallthru
        _
    $region64: #{tpu_custom_call.1} parent=5 // pred_fallthru
      _
  $region6: #{tpu_custom_call.1} parent=0 // loop_footer
    %s20 = sadd.s32 1, %s16
  $region7: #{tpu_custom_call.1} parent=0 // loop_footer_branch
    %15 = sbr.rel target = $region3
  $region8: #{tpu_custom_call.1} parent=0 // loop_exit
    _

</llo_original>
